<compile_context>
chip_gen: v6e
topology: v6e:2x2x1
jax: 0.10.0
libtpu: 0.0.40
codegen_flags: <defaults>
</compile_context>

<pallas_src>
import jax
import jax.numpy as jnp
from jax import lax
from jax.experimental import pallas as pl
from jax.experimental.pallas import tpu as pltpu


# -----------------------------------------------------------------------------
# Pallas kernel: only the serial LSTM recurrence. One invocation, statically
# unrolled time loop, loop-carried (h, c) vreg values.
# -----------------------------------------------------------------------------
def lstm_recurrence_kernel(len_ref, xp_ref, whh_ref, out_ref):
    """len_ref: [B,1] int32 valid lengths; xp_ref: [T,B,4H] pre-projected
    inputs (x_t @ W_ih^T + b, gate order i,f,o,g); whh_ref: [H,4H] = W_hh^T
    (same gate order); out_ref: [B,H] final hidden state."""
    T = xp_ref.shape[0]
    B, H = out_ref.shape

    lens = len_ref[...]                        # [B, 1] int32
    whh = whh_ref[...]                         # [H, 4H], resident across steps

    h = jnp.zeros((B, H), jnp.float32)
    c = jnp.zeros((B, H), jnp.float32)

    # T is tiny; statically unrolled straight-line code (no pl.when basic-block
    # boundaries) so the scheduler can overlap adjacent steps.
    for t in range(T):
        # One small MXU op per step: [B, H] @ [H, 4H]; input projection + bias
        # were precomputed into xp_ref.
        gates = xp_ref[t] + jnp.dot(h, whh, preferred_element_type=jnp.float32)

        # Full-width transcendentals (EUP), gate extraction via XLU rolls.
        sig = jax.nn.sigmoid(gates)            # [B, 4H]
        tnh = jnp.tanh(gates)                  # [B, 4H]
        i_g = sig[:, :H]                                    # lanes [0 , H )
        f_g = pltpu.roll(sig, shift=3 * H, axis=1)[:, :H]   # lanes [H ,2H) -> 0
        o_g = pltpu.roll(sig, shift=2 * H, axis=1)[:, :H]   # lanes [2H,3H) -> 0
        g_g = pltpu.roll(tnh, shift=H, axis=1)[:, :H]       # lanes [3H,4H) -> 0

        c_new = f_g * c + i_g * g_g
        h_new = o_g * jnp.tanh(c_new)

        # pack_padded_sequence semantics: rows shorter than t freeze.
        valid = lens > t                        # [B, 1]
        h = jnp.where(valid, h_new, h)
        c = jnp.where(valid, c_new, c)

    out_ref[...] = h.astype(out_ref.dtype)


# -----------------------------------------------------------------------------
# Weight packing (done once, outside jit): PyTorch LSTM params (gate order
# i,f,g,o) + embedding table -> kernel params with gate order (i, f, o, g).
#   proj_table[v] = emb[v] @ W_ih^T + (b_ih + b_hh)     [V, 4H]
#   row_nz[v]     = any(emb[v] != 0)                    [V]   (for lengths)
#   w_hh          = W_hh^T                              [H, 4H]
# -----------------------------------------------------------------------------
def pack_instruction_encoder_params(emb_table, w_ih_pt, w_hh_pt, b_ih, b_hh):
    H = w_hh_pt.shape[1]
    perm = jnp.concatenate([jnp.arange(0, 2 * H),        # i, f
                            jnp.arange(3 * H, 4 * H),    # o
                            jnp.arange(2 * H, 3 * H)])   # g
    w_ih = w_ih_pt[perm]                                 # [4H, E]
    b = (b_ih + b_hh)[perm]                              # [4H]
    proj_table = emb_table.astype(jnp.float32) @ w_ih.T + b           # [V, 4H]
    # Reproduces the module's ((emb != 0).sum(-1) != 0) reduction exactly
    # (padding_idx=0 row is all zeros).
    row_nz = jnp.any(emb_table != 0.0, axis=1).astype(jnp.int32)      # [V]
    w_hh = w_hh_pt[perm].T.astype(jnp.float32)                        # [H, 4H]
    return proj_table.astype(jnp.float32), row_nz, w_hh


# -----------------------------------------------------------------------------
# Full module forward (final_state_only=True path).
# -----------------------------------------------------------------------------
@jax.jit
def instruction_encoder_forward(tokens, proj_table, row_nz, w_hh):
    """tokens: [B, T] int -> final hidden state [B, H]."""
    tokens = tokens.astype(jnp.int32)
    B, T = tokens.shape
    H = w_hh.shape[0]

    # lengths = ((emb != 0).sum(-1) != 0).sum(-1), via the per-vocab nonzero
    # table (no [B, T, E] float reduction).
    lengths = jnp.take(row_nz, tokens, axis=0).sum(axis=1).astype(jnp.int32)

    # Gather directly in pre-projected space, time-major: [T, B, 4H].
    xp = jnp.take(proj_table, tokens.T, axis=0)

    # Pad batch to a full sublane group (multiple of 8).
    B_pad = ((B + 7) // 8) * 8
    if B_pad != B:
        xp = jnp.pad(xp, ((0, 0), (0, B_pad - B), (0, 0)))
        lengths = jnp.pad(lengths, (0, B_pad - B))
    lens2d = lengths.reshape(B_pad, 1)

    out = pl.pallas_call(
        lstm_recurrence_kernel,
        out_shape=jax.ShapeDtypeStruct((B_pad, H), jnp.float32),
        in_specs=[
            pl.BlockSpec(memory_space=pltpu.MemorySpace.VMEM),   # lengths
            pl.BlockSpec(memory_space=pltpu.MemorySpace.VMEM),   # xp [T,B,4H]
            pl.BlockSpec(memory_space=pltpu.MemorySpace.VMEM),   # W_hh
        ],
        out_specs=pl.BlockSpec(memory_space=pltpu.MemorySpace.VMEM),
    )(lens2d, xp, w_hh)

    return out[:B]


# -----------------------------------------------------------------------------
# Pure-JAX reference (PyTorch gate order / packed-sequence semantics).
# -----------------------------------------------------------------------------
def lstm_ref(x_tbe, lengths, w_ih_pt, w_hh_pt, b_ih, b_hh):
    T, B, E = x_tbe.shape
    H = w_hh_pt.shape[1]
    w_ih = w_ih_pt.T
    w_hh = w_hh_pt.T
    b = b_ih + b_hh

    def step(carry, inp):
        h, c = carry
        x_t, t = inp
        gates = x_t @ w_ih + h @ w_hh + b
        i_g = jax.nn.sigmoid(gates[:, :H])
        f_g = jax.nn.sigmoid(gates[:, H:2 * H])
        g_g = jnp.tanh(gates[:, 2 * H:3 * H])
        o_g = jax.nn.sigmoid(gates[:, 3 * H:])
        c_new = f_g * c + i_g * g_g
        h_new = o_g * jnp.tanh(c_new)
        valid = (lengths > t)[:, None]
        return (jnp.where(valid, h_new, h), jnp.where(valid, c_new, c)), None

    init = (jnp.zeros((B, H), jnp.float32), jnp.zeros((B, H), jnp.float32))
    (h, _), _ = lax.scan(step, init, (x_tbe, jnp.arange(T)))
    return h


if __name__ == "__main__":
    B, T, E, H, V = 2, 8, 32, 32, 50

    key = jax.random.PRNGKey(0)
    k_emb, k_wi, k_wh, k_bi, k_bh, k_tok = jax.random.split(key, 6)

    # Embedding table, padding_idx=0 row is zeros (as nn.Embedding(padding_idx=0)).
    emb_table = jax.random.normal(k_emb, (V, E), jnp.float32) * 0.1
    emb_table = emb_table.at[0].set(0.0)

    # LSTM params in PyTorch layout [4H, in] / [4H, H], gate order (i, f, g, o).
    scale = 1.0 / jnp.sqrt(H)
    w_ih_pt = jax.random.uniform(k_wi, (4 * H, E), jnp.float32, -1, 1) * scale
    w_hh_pt = jax.random.uniform(k_wh, (4 * H, H), jnp.float32, -1, 1) * scale
    b_ih = jax.random.uniform(k_bi, (4 * H,), jnp.float32, -1, 1) * scale
    b_hh = jax.random.uniform(k_bh, (4 * H,), jnp.float32, -1, 1) * scale

    proj_table, row_nz, w_hh = pack_instruction_encoder_params(
        emb_table, w_ih_pt, w_hh_pt, b_ih, b_hh)

    # Deterministic token sequences with trailing PAD (=0); lengths = [5, 8].
    tokens = jax.random.randint(k_tok, (B, T), 1, V, dtype=jnp.int32)
    tokens = tokens.at[0, 5:].set(0)

    out = instruction_encoder_forward(tokens, proj_table, row_nz, w_hh)
    out = jax.block_until_ready(out)

    # Verify against pure-JAX reference (module-style lengths from emb).
    emb = jnp.take(emb_table, tokens, axis=0)
    lengths = ((emb != 0.0).astype(jnp.int32).sum(2) != 0).astype(jnp.int32).sum(1)
    ref = lstm_ref(jnp.transpose(emb, (1, 0, 2)), lengths,
                   w_ih_pt, w_hh_pt, b_ih, b_hh)

    assert out.shape == (B, H)
    assert jnp.allclose(out, ref, atol=1e-4, rtol=1e-4), "mismatch vs reference"
    print("KERNEL_OK")
</pallas_src>

<mosaic_0001>
module attributes {stable_mosaic.version = 11 : i64} {
  func.func @lstm_recurrence_kernel(%arg0: memref<8x1xi32, #tpu.memory_space<vmem>>, %arg1: memref<8x8x128xf32, #tpu.memory_space<vmem>>, %arg2: memref<32x128xf32, #tpu.memory_space<vmem>>, %arg3: memref<8x32xf32, #tpu.memory_space<vmem>>) attributes {dimension_semantics = [], scalar_prefetch = 0 : i64, scratch_operands = 0 : i64, tpu.core_type = #tpu.core_type<tc>} {
    %c0 = arith.constant 0 : index
    %c0_0 = arith.constant 0 : index
    %0 = vector.load %arg0[%c0, %c0_0] : memref<8x1xi32, #tpu.memory_space<vmem>>, vector<8x1xi32>
    %c0_1 = arith.constant 0 : index
    %c0_2 = arith.constant 0 : index
    %1 = vector.load %arg2[%c0_1, %c0_2] : memref<32x128xf32, #tpu.memory_space<vmem>>, vector<32x128xf32>
    %cst = arith.constant 0.000000e+00 : f32
    %2 = vector.broadcast %cst : f32 to vector<8x32xf32>
    %cst_3 = arith.constant 0.000000e+00 : f32
    %3 = vector.broadcast %cst_3 : f32 to vector<8x32xf32>
    %c0_4 = arith.constant 0 : index
    %c0_5 = arith.constant 0 : index
    %c0_6 = arith.constant 0 : index
    %4 = vector.load %arg1[%c0_4, %c0_5, %c0_6] : memref<8x8x128xf32, #tpu.memory_space<vmem>>, vector<1x8x128xf32>
    %5 = vector.shape_cast %4 : vector<1x8x128xf32> to vector<8x128xf32>
    %cst_7 = arith.constant dense<0.000000e+00> : vector<8x128xf32>
    %6 = tpu.matmul %2, %1, %cst_7 {dimension_numbers = #tpu.dot_dimension_numbers<[1], [0], [0], [1], [0, 0, 1, 1], [], []>} : vector<8x32xf32>, vector<32x128xf32>, vector<8x128xf32> -> vector<8x128xf32>
    %7 = arith.addf %5, %6 : vector<8x128xf32>
    %8 = arith.negf %7 : vector<8x128xf32>
    %9 = math.exp %8 : vector<8x128xf32>
    %cst_8 = arith.constant 1.000000e+00 : f32
    %10 = vector.broadcast %cst_8 : f32 to vector<8x128xf32>
    %11 = arith.addf %10, %9 : vector<8x128xf32>
    %12 = arith.divf %10, %11 : vector<8x128xf32>
    %13 = math.tanh %7 : vector<8x128xf32>
    %14 = vector.extract_strided_slice %12 {offsets = [0, 0], sizes = [8, 32], strides = [1, 1]} : vector<8x128xf32> to vector<8x32xf32>
    %c96_i32 = arith.constant 96 : i32
    %15 = tpu.dynamic_rotate %12 by %c96_i32 dim 1 : vector<8x128xf32>, i32 -> vector<8x128xf32>
    %16 = vector.extract_strided_slice %15 {offsets = [0, 0], sizes = [8, 32], strides = [1, 1]} : vector<8x128xf32> to vector<8x32xf32>
    %c64_i32 = arith.constant 64 : i32
    %17 = tpu.dynamic_rotate %12 by %c64_i32 dim 1 : vector<8x128xf32>, i32 -> vector<8x128xf32>
    %18 = vector.extract_strided_slice %17 {offsets = [0, 0], sizes = [8, 32], strides = [1, 1]} : vector<8x128xf32> to vector<8x32xf32>
    %c32_i32 = arith.constant 32 : i32
    %19 = tpu.dynamic_rotate %13 by %c32_i32 dim 1 : vector<8x128xf32>, i32 -> vector<8x128xf32>
    %20 = vector.extract_strided_slice %19 {offsets = [0, 0], sizes = [8, 32], strides = [1, 1]} : vector<8x128xf32> to vector<8x32xf32>
    %21 = arith.mulf %16, %3 : vector<8x32xf32>
    %22 = arith.mulf %14, %20 : vector<8x32xf32>
    %23 = arith.addf %21, %22 : vector<8x32xf32>
    %24 = math.tanh %23 : vector<8x32xf32>
    %25 = arith.mulf %18, %24 : vector<8x32xf32>
    %c0_i32 = arith.constant 0 : i32
    %26 = vector.broadcast %c0_i32 : i32 to vector<8x1xi32>
    %27 = arith.cmpi sgt, %0, %26 : vector<8x1xi32>
    %28 = vector.shape_cast %27 : vector<8x1xi1> to vector<8x1xi1>
    %29 = vector.broadcast %28 : vector<8x1xi1> to vector<8x32xi1>
    %30 = arith.select %29, %25, %2 : vector<8x32xi1>, vector<8x32xf32>
    %31 = vector.shape_cast %27 : vector<8x1xi1> to vector<8x1xi1>
    %32 = vector.broadcast %31 : vector<8x1xi1> to vector<8x32xi1>
    %33 = arith.select %32, %23, %3 : vector<8x32xi1>, vector<8x32xf32>
    %c1 = arith.constant 1 : index
    %c0_9 = arith.constant 0 : index
    %c0_10 = arith.constant 0 : index
    %34 = vector.load %arg1[%c1, %c0_9, %c0_10] : memref<8x8x128xf32, #tpu.memory_space<vmem>>, vector<1x8x128xf32>
    %35 = vector.shape_cast %34 : vector<1x8x128xf32> to vector<8x128xf32>
    %cst_11 = arith.constant dense<0.000000e+00> : vector<8x128xf32>
    %36 = tpu.matmul %30, %1, %cst_11 {dimension_numbers = #tpu.dot_dimension_numbers<[1], [0], [0], [1], [0, 0, 1, 1], [], []>} : vector<8x32xf32>, vector<32x128xf32>, vector<8x128xf32> -> vector<8x128xf32>
    %37 = arith.addf %35, %36 : vector<8x128xf32>
    %38 = arith.negf %37 : vector<8x128xf32>
    %39 = math.exp %38 : vector<8x128xf32>
    %cst_12 = arith.constant 1.000000e+00 : f32
    %40 = vector.broadcast %cst_12 : f32 to vector<8x128xf32>
    %41 = arith.addf %40, %39 : vector<8x128xf32>
    %42 = arith.divf %40, %41 : vector<8x128xf32>
    %43 = math.tanh %37 : vector<8x128xf32>
    %44 = vector.extract_strided_slice %42 {offsets = [0, 0], sizes = [8, 32], strides = [1, 1]} : vector<8x128xf32> to vector<8x32xf32>
    %c96_i32_13 = arith.constant 96 : i32
    %45 = tpu.dynamic_rotate %42 by %c96_i32_13 dim 1 : vector<8x128xf32>, i32 -> vector<8x128xf32>
    %46 = vector.extract_strided_slice %45 {offsets = [0, 0], sizes = [8, 32], strides = [1, 1]} : vector<8x128xf32> to vector<8x32xf32>
    %c64_i32_14 = arith.constant 64 : i32
    %47 = tpu.dynamic_rotate %42 by %c64_i32_14 dim 1 : vector<8x128xf32>, i32 -> vector<8x128xf32>
    %48 = vector.extract_strided_slice %47 {offsets = [0, 0], sizes = [8, 32], strides = [1, 1]} : vector<8x128xf32> to vector<8x32xf32>
    %c32_i32_15 = arith.constant 32 : i32
    %49 = tpu.dynamic_rotate %43 by %c32_i32_15 dim 1 : vector<8x128xf32>, i32 -> vector<8x128xf32>
    %50 = vector.extract_strided_slice %49 {offsets = [0, 0], sizes = [8, 32], strides = [1, 1]} : vector<8x128xf32> to vector<8x32xf32>
    %51 = arith.mulf %46, %33 : vector<8x32xf32>
    %52 = arith.mulf %44, %50 : vector<8x32xf32>
    %53 = arith.addf %51, %52 : vector<8x32xf32>
    %54 = math.tanh %53 : vector<8x32xf32>
    %55 = arith.mulf %48, %54 : vector<8x32xf32>
    %c1_i32 = arith.constant 1 : i32
    %56 = vector.broadcast %c1_i32 : i32 to vector<8x1xi32>
    %57 = arith.cmpi sgt, %0, %56 : vector<8x1xi32>
    %58 = vector.shape_cast %57 : vector<8x1xi1> to vector<8x1xi1>
    %59 = vector.broadcast %58 : vector<8x1xi1> to vector<8x32xi1>
    %60 = arith.select %59, %55, %30 : vector<8x32xi1>, vector<8x32xf32>
    %61 = vector.shape_cast %57 : vector<8x1xi1> to vector<8x1xi1>
    %62 = vector.broadcast %61 : vector<8x1xi1> to vector<8x32xi1>
    %63 = arith.select %62, %53, %33 : vector<8x32xi1>, vector<8x32xf32>
    %c2 = arith.constant 2 : index
    %c0_16 = arith.constant 0 : index
    %c0_17 = arith.constant 0 : index
    %64 = vector.load %arg1[%c2, %c0_16, %c0_17] : memref<8x8x128xf32, #tpu.memory_space<vmem>>, vector<1x8x128xf32>
    %65 = vector.shape_cast %64 : vector<1x8x128xf32> to vector<8x128xf32>
    %cst_18 = arith.constant dense<0.000000e+00> : vector<8x128xf32>
    %66 = tpu.matmul %60, %1, %cst_18 {dimension_numbers = #tpu.dot_dimension_numbers<[1], [0], [0], [1], [0, 0, 1, 1], [], []>} : vector<8x32xf32>, vector<32x128xf32>, vector<8x128xf32> -> vector<8x128xf32>
    %67 = arith.addf %65, %66 : vector<8x128xf32>
    %68 = arith.negf %67 : vector<8x128xf32>
    %69 = math.exp %68 : vector<8x128xf32>
    %cst_19 = arith.constant 1.000000e+00 : f32
    %70 = vector.broadcast %cst_19 : f32 to vector<8x128xf32>
    %71 = arith.addf %70, %69 : vector<8x128xf32>
    %72 = arith.divf %70, %71 : vector<8x128xf32>
    %73 = math.tanh %67 : vector<8x128xf32>
    %74 = vector.extract_strided_slice %72 {offsets = [0, 0], sizes = [8, 32], strides = [1, 1]} : vector<8x128xf32> to vector<8x32xf32>
    %c96_i32_20 = arith.constant 96 : i32
    %75 = tpu.dynamic_rotate %72 by %c96_i32_20 dim 1 : vector<8x128xf32>, i32 -> vector<8x128xf32>
    %76 = vector.extract_strided_slice %75 {offsets = [0, 0], sizes = [8, 32], strides = [1, 1]} : vector<8x128xf32> to vector<8x32xf32>
    %c64_i32_21 = arith.constant 64 : i32
    %77 = tpu.dynamic_rotate %72 by %c64_i32_21 dim 1 : vector<8x128xf32>, i32 -> vector<8x128xf32>
    %78 = vector.extract_strided_slice %77 {offsets = [0, 0], sizes = [8, 32], strides = [1, 1]} : vector<8x128xf32> to vector<8x32xf32>
    %c32_i32_22 = arith.constant 32 : i32
    %79 = tpu.dynamic_rotate %73 by %c32_i32_22 dim 1 : vector<8x128xf32>, i32 -> vector<8x128xf32>
    %80 = vector.extract_strided_slice %79 {offsets = [0, 0], sizes = [8, 32], strides = [1, 1]} : vector<8x128xf32> to vector<8x32xf32>
    %81 = arith.mulf %76, %63 : vector<8x32xf32>
    %82 = arith.mulf %74, %80 : vector<8x32xf32>
    %83 = arith.addf %81, %82 : vector<8x32xf32>
    %84 = math.tanh %83 : vector<8x32xf32>
    %85 = arith.mulf %78, %84 : vector<8x32xf32>
    %c2_i32 = arith.constant 2 : i32
    %86 = vector.broadcast %c2_i32 : i32 to vector<8x1xi32>
    %87 = arith.cmpi sgt, %0, %86 : vector<8x1xi32>
    %88 = vector.shape_cast %87 : vector<8x1xi1> to vector<8x1xi1>
    %89 = vector.broadcast %88 : vector<8x1xi1> to vector<8x32xi1>
    %90 = arith.select %89, %85, %60 : vector<8x32xi1>, vector<8x32xf32>
    %91 = vector.shape_cast %87 : vector<8x1xi1> to vector<8x1xi1>
    %92 = vector.broadcast %91 : vector<8x1xi1> to vector<8x32xi1>
    %93 = arith.select %92, %83, %63 : vector<8x32xi1>, vector<8x32xf32>
    %c3 = arith.constant 3 : index
    %c0_23 = arith.constant 0 : index
    %c0_24 = arith.constant 0 : index
    %94 = vector.load %arg1[%c3, %c0_23, %c0_24] : memref<8x8x128xf32, #tpu.memory_space<vmem>>, vector<1x8x128xf32>
    %95 = vector.shape_cast %94 : vector<1x8x128xf32> to vector<8x128xf32>
    %cst_25 = arith.constant dense<0.000000e+00> : vector<8x128xf32>
    %96 = tpu.matmul %90, %1, %cst_25 {dimension_numbers = #tpu.dot_dimension_numbers<[1], [0], [0], [1], [0, 0, 1, 1], [], []>} : vector<8x32xf32>, vector<32x128xf32>, vector<8x128xf32> -> vector<8x128xf32>
    %97 = arith.addf %95, %96 : vector<8x128xf32>
    %98 = arith.negf %97 : vector<8x128xf32>
    %99 = math.exp %98 : vector<8x128xf32>
    %cst_26 = arith.constant 1.000000e+00 : f32
    %100 = vector.broadcast %cst_26 : f32 to vector<8x128xf32>
    %101 = arith.addf %100, %99 : vector<8x128xf32>
    %102 = arith.divf %100, %101 : vector<8x128xf32>
    %103 = math.tanh %97 : vector<8x128xf32>
    %104 = vector.extract_strided_slice %102 {offsets = [0, 0], sizes = [8, 32], strides = [1, 1]} : vector<8x128xf32> to vector<8x32xf32>
    %c96_i32_27 = arith.constant 96 : i32
    %105 = tpu.dynamic_rotate %102 by %c96_i32_27 dim 1 : vector<8x128xf32>, i32 -> vector<8x128xf32>
    %106 = vector.extract_strided_slice %105 {offsets = [0, 0], sizes = [8, 32], strides = [1, 1]} : vector<8x128xf32> to vector<8x32xf32>
    %c64_i32_28 = arith.constant 64 : i32
    %107 = tpu.dynamic_rotate %102 by %c64_i32_28 dim 1 : vector<8x128xf32>, i32 -> vector<8x128xf32>
    %108 = vector.extract_strided_slice %107 {offsets = [0, 0], sizes = [8, 32], strides = [1, 1]} : vector<8x128xf32> to vector<8x32xf32>
    %c32_i32_29 = arith.constant 32 : i32
    %109 = tpu.dynamic_rotate %103 by %c32_i32_29 dim 1 : vector<8x128xf32>, i32 -> vector<8x128xf32>
    %110 = vector.extract_strided_slice %109 {offsets = [0, 0], sizes = [8, 32], strides = [1, 1]} : vector<8x128xf32> to vector<8x32xf32>
    %111 = arith.mulf %106, %93 : vector<8x32xf32>
    %112 = arith.mulf %104, %110 : vector<8x32xf32>
    %113 = arith.addf %111, %112 : vector<8x32xf32>
    %114 = math.tanh %113 : vector<8x32xf32>
    %115 = arith.mulf %108, %114 : vector<8x32xf32>
    %c3_i32 = arith.constant 3 : i32
    %116 = vector.broadcast %c3_i32 : i32 to vector<8x1xi32>
    %117 = arith.cmpi sgt, %0, %116 : vector<8x1xi32>
    %118 = vector.shape_cast %117 : vector<8x1xi1> to vector<8x1xi1>
    %119 = vector.broadcast %118 : vector<8x1xi1> to vector<8x32xi1>
    %120 = arith.select %119, %115, %90 : vector<8x32xi1>, vector<8x32xf32>
    %121 = vector.shape_cast %117 : vector<8x1xi1> to vector<8x1xi1>
    %122 = vector.broadcast %121 : vector<8x1xi1> to vector<8x32xi1>
    %123 = arith.select %122, %113, %93 : vector<8x32xi1>, vector<8x32xf32>
    %c4 = arith.constant 4 : index
    %c0_30 = arith.constant 0 : index
    %c0_31 = arith.constant 0 : index
    %124 = vector.load %arg1[%c4, %c0_30, %c0_31] : memref<8x8x128xf32, #tpu.memory_space<vmem>>, vector<1x8x128xf32>
    %125 = vector.shape_cast %124 : vector<1x8x128xf32> to vector<8x128xf32>
    %cst_32 = arith.constant dense<0.000000e+00> : vector<8x128xf32>
    %126 = tpu.matmul %120, %1, %cst_32 {dimension_numbers = #tpu.dot_dimension_numbers<[1], [0], [0], [1], [0, 0, 1, 1], [], []>} : vector<8x32xf32>, vector<32x128xf32>, vector<8x128xf32> -> vector<8x128xf32>
    %127 = arith.addf %125, %126 : vector<8x128xf32>
    %128 = arith.negf %127 : vector<8x128xf32>
    %129 = math.exp %128 : vector<8x128xf32>
    %cst_33 = arith.constant 1.000000e+00 : f32
    %130 = vector.broadcast %cst_33 : f32 to vector<8x128xf32>
    %131 = arith.addf %130, %129 : vector<8x128xf32>
    %132 = arith.divf %130, %131 : vector<8x128xf32>
    %133 = math.tanh %127 : vector<8x128xf32>
    %134 = vector.extract_strided_slice %132 {offsets = [0, 0], sizes = [8, 32], strides = [1, 1]} : vector<8x128xf32> to vector<8x32xf32>
    %c96_i32_34 = arith.constant 96 : i32
    %135 = tpu.dynamic_rotate %132 by %c96_i32_34 dim 1 : vector<8x128xf32>, i32 -> vector<8x128xf32>
    %136 = vector.extract_strided_slice %135 {offsets = [0, 0], sizes = [8, 32], strides = [1, 1]} : vector<8x128xf32> to vector<8x32xf32>
    %c64_i32_35 = arith.constant 64 : i32
    %137 = tpu.dynamic_rotate %132 by %c64_i32_35 dim 1 : vector<8x128xf32>, i32 -> vector<8x128xf32>
    %138 = vector.extract_strided_slice %137 {offsets = [0, 0], sizes = [8, 32], strides = [1, 1]} : vector<8x128xf32> to vector<8x32xf32>
    %c32_i32_36 = arith.constant 32 : i32
    %139 = tpu.dynamic_rotate %133 by %c32_i32_36 dim 1 : vector<8x128xf32>, i32 -> vector<8x128xf32>
    %140 = vector.extract_strided_slice %139 {offsets = [0, 0], sizes = [8, 32], strides = [1, 1]} : vector<8x128xf32> to vector<8x32xf32>
    %141 = arith.mulf %136, %123 : vector<8x32xf32>
    %142 = arith.mulf %134, %140 : vector<8x32xf32>
    %143 = arith.addf %141, %142 : vector<8x32xf32>
    %144 = math.tanh %143 : vector<8x32xf32>
    %145 = arith.mulf %138, %144 : vector<8x32xf32>
    %c4_i32 = arith.constant 4 : i32
    %146 = vector.broadcast %c4_i32 : i32 to vector<8x1xi32>
    %147 = arith.cmpi sgt, %0, %146 : vector<8x1xi32>
    %148 = vector.shape_cast %147 : vector<8x1xi1> to vector<8x1xi1>
    %149 = vector.broadcast %148 : vector<8x1xi1> to vector<8x32xi1>
    %150 = arith.select %149, %145, %120 : vector<8x32xi1>, vector<8x32xf32>
    %151 = vector.shape_cast %147 : vector<8x1xi1> to vector<8x1xi1>
    %152 = vector.broadcast %151 : vector<8x1xi1> to vector<8x32xi1>
    %153 = arith.select %152, %143, %123 : vector<8x32xi1>, vector<8x32xf32>
    %c5 = arith.constant 5 : index
    %c0_37 = arith.constant 0 : index
    %c0_38 = arith.constant 0 : index
    %154 = vector.load %arg1[%c5, %c0_37, %c0_38] : memref<8x8x128xf32, #tpu.memory_space<vmem>>, vector<1x8x128xf32>
    %155 = vector.shape_cast %154 : vector<1x8x128xf32> to vector<8x128xf32>
    %cst_39 = arith.constant dense<0.000000e+00> : vector<8x128xf32>
    %156 = tpu.matmul %150, %1, %cst_39 {dimension_numbers = #tpu.dot_dimension_numbers<[1], [0], [0], [1], [0, 0, 1, 1], [], []>} : vector<8x32xf32>, vector<32x128xf32>, vector<8x128xf32> -> vector<8x128xf32>
    %157 = arith.addf %155, %156 : vector<8x128xf32>
    %158 = arith.negf %157 : vector<8x128xf32>
    %159 = math.exp %158 : vector<8x128xf32>
    %cst_40 = arith.constant 1.000000e+00 : f32
    %160 = vector.broadcast %cst_40 : f32 to vector<8x128xf32>
    %161 = arith.addf %160, %159 : vector<8x128xf32>
    %162 = arith.divf %160, %161 : vector<8x128xf32>
    %163 = math.tanh %157 : vector<8x128xf32>
    %164 = vector.extract_strided_slice %162 {offsets = [0, 0], sizes = [8, 32], strides = [1, 1]} : vector<8x128xf32> to vector<8x32xf32>
    %c96_i32_41 = arith.constant 96 : i32
    %165 = tpu.dynamic_rotate %162 by %c96_i32_41 dim 1 : vector<8x128xf32>, i32 -> vector<8x128xf32>
    %166 = vector.extract_strided_slice %165 {offsets = [0, 0], sizes = [8, 32], strides = [1, 1]} : vector<8x128xf32> to vector<8x32xf32>
    %c64_i32_42 = arith.constant 64 : i32
    %167 = tpu.dynamic_rotate %162 by %c64_i32_42 dim 1 : vector<8x128xf32>, i32 -> vector<8x128xf32>
    %168 = vector.extract_strided_slice %167 {offsets = [0, 0], sizes = [8, 32], strides = [1, 1]} : vector<8x128xf32> to vector<8x32xf32>
    %c32_i32_43 = arith.constant 32 : i32
    %169 = tpu.dynamic_rotate %163 by %c32_i32_43 dim 1 : vector<8x128xf32>, i32 -> vector<8x128xf32>
    %170 = vector.extract_strided_slice %169 {offsets = [0, 0], sizes = [8, 32], strides = [1, 1]} : vector<8x128xf32> to vector<8x32xf32>
    %171 = arith.mulf %166, %153 : vector<8x32xf32>
    %172 = arith.mulf %164, %170 : vector<8x32xf32>
    %173 = arith.addf %171, %172 : vector<8x32xf32>
    %174 = math.tanh %173 : vector<8x32xf32>
    %175 = arith.mulf %168, %174 : vector<8x32xf32>
    %c5_i32 = arith.constant 5 : i32
    %176 = vector.broadcast %c5_i32 : i32 to vector<8x1xi32>
    %177 = arith.cmpi sgt, %0, %176 : vector<8x1xi32>
    %178 = vector.shape_cast %177 : vector<8x1xi1> to vector<8x1xi1>
    %179 = vector.broadcast %178 : vector<8x1xi1> to vector<8x32xi1>
    %180 = arith.select %179, %175, %150 : vector<8x32xi1>, vector<8x32xf32>
    %181 = vector.shape_cast %177 : vector<8x1xi1> to vector<8x1xi1>
    %182 = vector.broadcast %181 : vector<8x1xi1> to vector<8x32xi1>
    %183 = arith.select %182, %173, %153 : vector<8x32xi1>, vector<8x32xf32>
    %c6 = arith.constant 6 : index
    %c0_44 = arith.constant 0 : index
    %c0_45 = arith.constant 0 : index
    %184 = vector.load %arg1[%c6, %c0_44, %c0_45] : memref<8x8x128xf32, #tpu.memory_space<vmem>>, vector<1x8x128xf32>
    %185 = vector.shape_cast %184 : vector<1x8x128xf32> to vector<8x128xf32>
    %cst_46 = arith.constant dense<0.000000e+00> : vector<8x128xf32>
    %186 = tpu.matmul %180, %1, %cst_46 {dimension_numbers = #tpu.dot_dimension_numbers<[1], [0], [0], [1], [0, 0, 1, 1], [], []>} : vector<8x32xf32>, vector<32x128xf32>, vector<8x128xf32> -> vector<8x128xf32>
    %187 = arith.addf %185, %186 : vector<8x128xf32>
    %188 = arith.negf %187 : vector<8x128xf32>
    %189 = math.exp %188 : vector<8x128xf32>
    %cst_47 = arith.constant 1.000000e+00 : f32
    %190 = vector.broadcast %cst_47 : f32 to vector<8x128xf32>
    %191 = arith.addf %190, %189 : vector<8x128xf32>
    %192 = arith.divf %190, %191 : vector<8x128xf32>
    %193 = math.tanh %187 : vector<8x128xf32>
    %194 = vector.extract_strided_slice %192 {offsets = [0, 0], sizes = [8, 32], strides = [1, 1]} : vector<8x128xf32> to vector<8x32xf32>
    %c96_i32_48 = arith.constant 96 : i32
    %195 = tpu.dynamic_rotate %192 by %c96_i32_48 dim 1 : vector<8x128xf32>, i32 -> vector<8x128xf32>
    %196 = vector.extract_strided_slice %195 {offsets = [0, 0], sizes = [8, 32], strides = [1, 1]} : vector<8x128xf32> to vector<8x32xf32>
    %c64_i32_49 = arith.constant 64 : i32
    %197 = tpu.dynamic_rotate %192 by %c64_i32_49 dim 1 : vector<8x128xf32>, i32 -> vector<8x128xf32>
    %198 = vector.extract_strided_slice %197 {offsets = [0, 0], sizes = [8, 32], strides = [1, 1]} : vector<8x128xf32> to vector<8x32xf32>
    %c32_i32_50 = arith.constant 32 : i32
    %199 = tpu.dynamic_rotate %193 by %c32_i32_50 dim 1 : vector<8x128xf32>, i32 -> vector<8x128xf32>
    %200 = vector.extract_strided_slice %199 {offsets = [0, 0], sizes = [8, 32], strides = [1, 1]} : vector<8x128xf32> to vector<8x32xf32>
    %201 = arith.mulf %196, %183 : vector<8x32xf32>
    %202 = arith.mulf %194, %200 : vector<8x32xf32>
    %203 = arith.addf %201, %202 : vector<8x32xf32>
    %204 = math.tanh %203 : vector<8x32xf32>
    %205 = arith.mulf %198, %204 : vector<8x32xf32>
    %c6_i32 = arith.constant 6 : i32
    %206 = vector.broadcast %c6_i32 : i32 to vector<8x1xi32>
    %207 = arith.cmpi sgt, %0, %206 : vector<8x1xi32>
    %208 = vector.shape_cast %207 : vector<8x1xi1> to vector<8x1xi1>
    %209 = vector.broadcast %208 : vector<8x1xi1> to vector<8x32xi1>
    %210 = arith.select %209, %205, %180 : vector<8x32xi1>, vector<8x32xf32>
    %211 = vector.shape_cast %207 : vector<8x1xi1> to vector<8x1xi1>
    %212 = vector.broadcast %211 : vector<8x1xi1> to vector<8x32xi1>
    %213 = arith.select %212, %203, %183 : vector<8x32xi1>, vector<8x32xf32>
    %c7 = arith.constant 7 : index
    %c0_51 = arith.constant 0 : index
    %c0_52 = arith.constant 0 : index
    %214 = vector.load %arg1[%c7, %c0_51, %c0_52] : memref<8x8x128xf32, #tpu.memory_space<vmem>>, vector<1x8x128xf32>
    %215 = vector.shape_cast %214 : vector<1x8x128xf32> to vector<8x128xf32>
    %cst_53 = arith.constant dense<0.000000e+00> : vector<8x128xf32>
    %216 = tpu.matmul %210, %1, %cst_53 {dimension_numbers = #tpu.dot_dimension_numbers<[1], [0], [0], [1], [0, 0, 1, 1], [], []>} : vector<8x32xf32>, vector<32x128xf32>, vector<8x128xf32> -> vector<8x128xf32>
    %217 = arith.addf %215, %216 : vector<8x128xf32>
    %218 = arith.negf %217 : vector<8x128xf32>
    %219 = math.exp %218 : vector<8x128xf32>
    %cst_54 = arith.constant 1.000000e+00 : f32
    %220 = vector.broadcast %cst_54 : f32 to vector<8x128xf32>
    %221 = arith.addf %220, %219 : vector<8x128xf32>
    %222 = arith.divf %220, %221 : vector<8x128xf32>
    %223 = math.tanh %217 : vector<8x128xf32>
    %224 = vector.extract_strided_slice %222 {offsets = [0, 0], sizes = [8, 32], strides = [1, 1]} : vector<8x128xf32> to vector<8x32xf32>
    %c96_i32_55 = arith.constant 96 : i32
    %225 = tpu.dynamic_rotate %222 by %c96_i32_55 dim 1 : vector<8x128xf32>, i32 -> vector<8x128xf32>
    %226 = vector.extract_strided_slice %225 {offsets = [0, 0], sizes = [8, 32], strides = [1, 1]} : vector<8x128xf32> to vector<8x32xf32>
    %c64_i32_56 = arith.constant 64 : i32
    %227 = tpu.dynamic_rotate %222 by %c64_i32_56 dim 1 : vector<8x128xf32>, i32 -> vector<8x128xf32>
    %228 = vector.extract_strided_slice %227 {offsets = [0, 0], sizes = [8, 32], strides = [1, 1]} : vector<8x128xf32> to vector<8x32xf32>
    %c32_i32_57 = arith.constant 32 : i32
    %229 = tpu.dynamic_rotate %223 by %c32_i32_57 dim 1 : vector<8x128xf32>, i32 -> vector<8x128xf32>
    %230 = vector.extract_strided_slice %229 {offsets = [0, 0], sizes = [8, 32], strides = [1, 1]} : vector<8x128xf32> to vector<8x32xf32>
    %231 = arith.mulf %226, %213 : vector<8x32xf32>
    %232 = arith.mulf %224, %230 : vector<8x32xf32>
    %233 = arith.addf %231, %232 : vector<8x32xf32>
    %234 = math.tanh %233 : vector<8x32xf32>
    %235 = arith.mulf %228, %234 : vector<8x32xf32>
    %c7_i32 = arith.constant 7 : i32
    %236 = vector.broadcast %c7_i32 : i32 to vector<8x1xi32>
    %237 = arith.cmpi sgt, %0, %236 : vector<8x1xi32>
    %238 = vector.shape_cast %237 : vector<8x1xi1> to vector<8x1xi1>
    %239 = vector.broadcast %238 : vector<8x1xi1> to vector<8x32xi1>
    %240 = arith.select %239, %235, %210 : vector<8x32xi1>, vector<8x32xf32>
    %c0_58 = arith.constant 0 : index
    %c0_59 = arith.constant 0 : index
    %241 = vector.load %arg3[%c0_58, %c0_59] : memref<8x32xf32, #tpu.memory_space<vmem>>, vector<8x32xf32>
    tpu.vector_store %arg3[%c0_58, %c0_59], %240 {strides = array<i32>} : memref<8x32xf32, #tpu.memory_space<vmem>>, vector<8x32xf32>,
    return
  }
}

</mosaic_0001>

<llo_original>
// kernel: instruction_encoder_forward.1
$region0: #{instruction_encoder_forward.1}
  #allocation0 [shape = 'u32[]', space=smem, size = 0x4, offset = 0x4, fixed_abs, tag = 'smem constant byte address 0x4 - core index']
  #allocation1 [shape = 'u32[144,128]{1,0:T(1,128)}', space=vmem, size = 0x12000, scoped, tag = 'internal scratch']
  %s0 = inlined_call_operand.vmem [shape: s32[8,1], index: 0, kind: input, shape index: {}]
  %s1 = inlined_call_operand.vmem [shape: f32[8,8,128], index: 1, kind: input, shape index: {}]
  %s2 = inlined_call_operand.vmem [shape: f32[32,128], index: 2, kind: input, shape index: {}]
  %s3 = inlined_call_operand.vmem [shape: f32[8,32], index: 3, kind: output, shape index: {}]
  %s4 = sld [smem:[#allocation0]]
  $region22: #{instruction_encoder_forward.1} parent=0
    _
  %s6 = ssub.s32 1, %s4
  %s7 = scalar_select 0, %s6, %s4
  // Predicated region
  $region2: #{instruction_encoder_forward.1} parent=0 // pred_check
    _
  $region3: #{instruction_encoder_forward.1} parent=0 // pred_check_branch
    %9 = sbr.rel (0) target = $region5
  $region4: #{instruction_encoder_forward.1} parent=0 // pred_region
    _
  $region5: #{instruction_encoder_forward.1} parent=0 // pred_fallthru
    _
  // Predicated region
  $region6: #{instruction_encoder_forward.1} parent=0 // pred_check
    _
  $region7: #{instruction_encoder_forward.1} parent=0 // pred_check_branch
    %11 = sbr.rel (0) target = $region9
  $region8: #{instruction_encoder_forward.1} parent=0 // pred_region
    _
  $region9: #{instruction_encoder_forward.1} parent=0 // pred_fallthru
    _
  // Predicated region
  $region10: #{instruction_encoder_forward.1} parent=0 // pred_check
    _
  $region11: #{instruction_encoder_forward.1} parent=0 // pred_check_branch
    %13 = sbr.rel (0) target = $region13
  $region12: #{instruction_encoder_forward.1} parent=0 // pred_region
    _
  $region13: #{instruction_encoder_forward.1} parent=0 // pred_fallthru
    _
  %v14 = vld [vmem:[%s0] sm:$0xff]
  %v15 = vld [vmem:[%s2] sm:$0xff]
  %v16 = vld [vmem:[%s2 + $0x8] sm:$0xff]
  %v17 = vld [vmem:[%s2 + $0x10] sm:$0xff]
  %v18 = vld [vmem:[%s2 + $0x18] sm:$0xff]
  %v19 = vld [vmem:[%s1] sm:$0xff]
  %vm20 = vcmask 261120
  %v22 = vsel %vm20, 0.0, 0
  %24 = vmatprep.subr.mxu0 0.0
  %25 = vmatpush1.msra.mxu0 0.0
  %26 = vmatprep.subr.mxu0 0.0
  %27 = vmatpush1.msra.mxu0 0.0
  %28 = vmatprep.subr.mxu0 0.0
  %29 = vmatpush1.msra.mxu0 0.0
  %30 = vmatprep.subr.mxu0 0.0
  %31 = vmatpush1.msra.mxu0 0.0
  %32 = vmatprep.subr.mxu0 0.0
  %33 = vmatpush1.msra.mxu0 0.0
  %34 = vmatprep.subr.mxu0 0.0
  %35 = vmatpush1.msra.mxu0 0.0
  %36 = vmatprep.subr.mxu0 0.0
  %37 = vmatpush1.msra.mxu0 0.0
  %38 = vmatprep.subr.mxu0 0.0
  %39 = vmatpush1.msra.mxu0 0.0
  %40 = vmatprep.subr.mxu0 0.0
  %41 = vmatpush1.msra.mxu0 0.0
  %42 = vmatprep.subr.mxu0 0.0
  %43 = vmatpush1.msra.mxu0 0.0
  %44 = vmatprep.subr.mxu0 0.0
  %45 = vmatpush1.msra.mxu0 0.0
  %46 = vmatprep.subr.mxu0 0.0
  %47 = vmatpush1.msra.mxu0 0.0
  %48 = vmatprep.subr.mxu0 0.0
  %49 = vmatpush1.msra.mxu0 %v18
  %50 = vmatprep.subr.mxu0 0.0
  %51 = vmatpush1.msra.mxu0 %v17
  %52 = vmatprep.subr.mxu0 0.0
  %53 = vmatpush1.msra.mxu0 %v16
  %54 = vmatprep.subr.mxu0 0.0
  %55 = vmatpush1.msra.mxu0 %v15
  %56 = vmatprep.subr.mxu0 0.0
  %57 = vmatpush2.msra.mxu0 0.0
  %58 = vmatprep.subr.mxu0 0.0
  %59 = vmatpush2.msra.mxu0 0.0
  %60 = vmatprep.subr.mxu0 0.0
  %61 = vmatpush2.msra.mxu0 0.0
  %62 = vmatprep.subr.mxu0 0.0
  %63 = vmatpush2.msra.mxu0 0.0
  %64 = vmatprep.subr.mxu0 0.0
  %65 = vmatpush2.msra.mxu0 0.0
  %66 = vmatprep.subr.mxu0 0.0
  %67 = vmatpush2.msra.mxu0 0.0
  %68 = vmatprep.subr.mxu0 0.0
  %69 = vmatpush2.msra.mxu0 0.0
  %70 = vmatprep.subr.mxu0 0.0
  %71 = vmatpush2.msra.mxu0 0.0
  %72 = vmatprep.subr.mxu0 0.0
  %73 = vmatpush2.msra.mxu0 0.0
  %74 = vmatprep.subr.mxu0 0.0
  %75 = vmatpush2.msra.mxu0 0.0
  %76 = vmatprep.subr.mxu0 0.0
  %77 = vmatpush2.msra.mxu0 0.0
  %78 = vmatprep.subr.mxu0 0.0
  %79 = vmatpush2.msra.mxu0 0.0
  %80 = vmatprep.subr.mxu0 0.0
  %81 = vmatpush2.msra.mxu0 0.0
  %82 = vmatprep.subr.mxu0 0.0
  %83 = vmatpush2.msra.mxu0 0.0
  %84 = vmatprep.subr.mxu0 0.0
  %85 = vmatpush2.msra.mxu0 0.0
  %86 = vmatprep.subr.mxu0 0.0
  %87 = vmatpush2.msra.mxu0 0.0
  %88 = vmatprep.mubr.f32.mxu0 0.0
  %89 = vmatmul.mubr.f32.gmra.mxu0 %v22
  %v90 = vpop.f32.mrf.mxu0
  %v91 = vadd.f32 0.0, %v90
  %v92 = vpop.f32.mrf.mxu0
  %93 = vdwg.mxu0
  %v94 = vadd.f32 %v19, %v91
  %v95 = vxor.u32 %v94, 2147483648
  %v96 = vmul.f32 %v95, 1.442695
  %v97 = vpow.pop %v96
  %v98 = vadd.f32 %v97, 1.0
  %v99 = vrcp.pop %v98
  %v100 = vmul.f32 1.0, %v99
  %v101 = vtanh.pop %v94
  %102 = vrot.lane.b32.xlu0 %v100, 96
  %v103 = vpop.permute.xlu0 %102
  %104 = vrot.lane.b32.xlu0 %v100, 64
  %v105 = vpop.permute.xlu0 %104
  %106 = vrot.lane.b32.xlu0 %v101, 32
  %v107 = vpop.permute.xlu0 %106
  %v108 = vmul.f32 %v103, 0.0
  %v109 = vmul.f32 %v100, %v107
  %v110 = vadd.f32 %v108, %v109
  %v111 = vtanh.pop %v110
  %v112 = vmul.f32 %v105, %v111
  %vm113 = vcmp.gt.s32.totalorder %v14, 0
  %v114 = vsel %vm113, 1, 0
  %115 = vset.pattern.permute.xlu0 0
  %116 = vperm.xlu0 %115, %v114
  %v117 = vpop.permute.xlu0 %116
  %vm118 = vcmp.eq.s32.totalorder %v117, 1
  %v119 = vsel %vm118, %v112, 0.0
  %v120 = vsel %vm118, %v110, 0.0
  %s121 = scalar_lea.vmem %s1, 8
  %v122 = vld [vmem:[%s121] sm:$0xff]
  %v124 = vsel %vm20, %v119, 0
  %126 = vmatprep.subr.mxu0 0.0
  %127 = vmatpush1.msra.mxu0 0.0
  %128 = vmatprep.subr.mxu0 0.0
  %129 = vmatpush1.msra.mxu0 0.0
  %130 = vmatprep.subr.mxu0 0.0
  %131 = vmatpush1.msra.mxu0 0.0
  %132 = vmatprep.subr.mxu0 0.0
  %133 = vmatpush1.msra.mxu0 0.0
  %134 = vmatprep.subr.mxu0 0.0
  %135 = vmatpush1.msra.mxu0 0.0
  %136 = vmatprep.subr.mxu0 0.0
  %137 = vmatpush1.msra.mxu0 0.0
  %138 = vmatprep.subr.mxu0 0.0
  %139 = vmatpush1.msra.mxu0 0.0
  %140 = vmatprep.subr.mxu0 0.0
  %141 = vmatpush1.msra.mxu0 0.0
  %142 = vmatprep.subr.mxu0 0.0
  %143 = vmatpush1.msra.mxu0 0.0
  %144 = vmatprep.subr.mxu0 0.0
  %145 = vmatpush1.msra.mxu0 0.0
  %146 = vmatprep.subr.mxu0 0.0
  %147 = vmatpush1.msra.mxu0 0.0
  %148 = vmatprep.subr.mxu0 0.0
  %149 = vmatpush1.msra.mxu0 0.0
  %150 = vmatprep.subr.mxu0 0.0
  %151 = vmatpush1.msra.mxu0 %v18
  %152 = vmatprep.subr.mxu0 0.0
  %153 = vmatpush1.msra.mxu0 %v17
  %154 = vmatprep.subr.mxu0 0.0
  %155 = vmatpush1.msra.mxu0 %v16
  %156 = vmatprep.subr.mxu0 0.0
  %157 = vmatpush1.msra.mxu0 %v15
  %158 = vmatprep.subr.mxu0 0.0
  %159 = vmatpush2.msra.mxu0 0.0
  %160 = vmatprep.subr.mxu0 0.0
  %161 = vmatpush2.msra.mxu0 0.0
  %162 = vmatprep.subr.mxu0 0.0
  %163 = vmatpush2.msra.mxu0 0.0
  %164 = vmatprep.subr.mxu0 0.0
  %165 = vmatpush2.msra.mxu0 0.0
  %166 = vmatprep.subr.mxu0 0.0
  %167 = vmatpush2.msra.mxu0 0.0
  %168 = vmatprep.subr.mxu0 0.0
  %169 = vmatpush2.msra.mxu0 0.0
  %170 = vmatprep.subr.mxu0 0.0
  %171 = vmatpush2.msra.mxu0 0.0
  %172 = vmatprep.subr.mxu0 0.0
  %173 = vmatpush2.msra.mxu0 0.0
  %174 = vmatprep.subr.mxu0 0.0
  %175 = vmatpush2.msra.mxu0 0.0
  %176 = vmatprep.subr.mxu0 0.0
  %177 = vmatpush2.msra.mxu0 0.0
  %178 = vmatprep.subr.mxu0 0.0
  %179 = vmatpush2.msra.mxu0 0.0
  %180 = vmatprep.subr.mxu0 0.0
  %181 = vmatpush2.msra.mxu0 0.0
  %182 = vmatprep.subr.mxu0 0.0
  %183 = vmatpush2.msra.mxu0 0.0
  %184 = vmatprep.subr.mxu0 0.0
  %185 = vmatpush2.msra.mxu0 0.0
  %186 = vmatprep.subr.mxu0 0.0
  %187 = vmatpush2.msra.mxu0 0.0
  %188 = vmatprep.subr.mxu0 0.0
  %189 = vmatpush2.msra.mxu0 0.0
  %190 = vmatprep.mubr.f32.mxu0 0.0
  %191 = vmatmul.mubr.f32.gmra.mxu0 %v124
  %v192 = vpop.f32.mrf.mxu0
  %v193 = vadd.f32 0.0, %v192
  %v194 = vpop.f32.mrf.mxu0
  %195 = vdwg.mxu0
  %v196 = vadd.f32 %v122, %v193
  %v197 = vxor.u32 %v196, 2147483648
  %v198 = vmul.f32 %v197, 1.442695
  %v199 = vpow.pop %v198
  %v200 = vadd.f32 %v199, 1.0
  %v201 = vrcp.pop %v200
  %v202 = vmul.f32 1.0, %v201
  %v203 = vtanh.pop %v196
  %204 = vrot.lane.b32.xlu0 %v202, 96
  %v205 = vpop.permute.xlu0 %204
  %206 = vrot.lane.b32.xlu0 %v202, 64
  %v207 = vpop.permute.xlu0 %206
  %208 = vrot.lane.b32.xlu0 %v203, 32
  %v209 = vpop.permute.xlu0 %208
  %v210 = vmul.f32 %v205, %v120
  %v211 = vmul.f32 %v202, %v209
  %v212 = vadd.f32 %v210, %v211
  %v213 = vtanh.pop %v212
  %v214 = vmul.f32 %v207, %v213
  %vm215 = vcmp.gt.s32.totalorder %v14, 1
  %v216 = vsel %vm215, 1, 0
  %217 = vset.pattern.permute.xlu0 0
  %218 = vperm.xlu0 %217, %v216
  %v219 = vpop.permute.xlu0 %218
  %vm220 = vcmp.eq.s32.totalorder %v219, 1
  %v221 = vsel %vm220, %v214, %v119
  %v222 = vsel %vm220, %v212, %v120
  %s223 = scalar_lea.vmem %s1, 16
  %v224 = vld [vmem:[%s223] sm:$0xff]
  %v226 = vsel %vm20, %v221, 0
  %228 = vmatprep.subr.mxu0 0.0
  %229 = vmatpush1.msra.mxu0 0.0
  %230 = vmatprep.subr.mxu0 0.0
  %231 = vmatpush1.msra.mxu0 0.0
  %232 = vmatprep.subr.mxu0 0.0
  %233 = vmatpush1.msra.mxu0 0.0
  %234 = vmatprep.subr.mxu0 0.0
  %235 = vmatpush1.msra.mxu0 0.0
  %236 = vmatprep.subr.mxu0 0.0
  %237 = vmatpush1.msra.mxu0 0.0
  %238 = vmatprep.subr.mxu0 0.0
  %239 = vmatpush1.msra.mxu0 0.0
  %240 = vmatprep.subr.mxu0 0.0
  %241 = vmatpush1.msra.mxu0 0.0
  %242 = vmatprep.subr.mxu0 0.0
  %243 = vmatpush1.msra.mxu0 0.0
  %244 = vmatprep.subr.mxu0 0.0
  %245 = vmatpush1.msra.mxu0 0.0
  %246 = vmatprep.subr.mxu0 0.0
  %247 = vmatpush1.msra.mxu0 0.0
  %248 = vmatprep.subr.mxu0 0.0
  %249 = vmatpush1.msra.mxu0 0.0
  %250 = vmatprep.subr.mxu0 0.0
  %251 = vmatpush1.msra.mxu0 0.0
  %252 = vmatprep.subr.mxu0 0.0
  %253 = vmatpush1.msra.mxu0 %v18
  %254 = vmatprep.subr.mxu0 0.0
  %255 = vmatpush1.msra.mxu0 %v17
  %256 = vmatprep.subr.mxu0 0.0
  %257 = vmatpush1.msra.mxu0 %v16
  %258 = vmatprep.subr.mxu0 0.0
  %259 = vmatpush1.msra.mxu0 %v15
  %260 = vmatprep.subr.mxu0 0.0
  %261 = vmatpush2.msra.mxu0 0.0
  %262 = vmatprep.subr.mxu0 0.0
  %263 = vmatpush2.msra.mxu0 0.0
  %264 = vmatprep.subr.mxu0 0.0
  %265 = vmatpush2.msra.mxu0 0.0
  %266 = vmatprep.subr.mxu0 0.0
  %267 = vmatpush2.msra.mxu0 0.0
  %268 = vmatprep.subr.mxu0 0.0
  %269 = vmatpush2.msra.mxu0 0.0
  %270 = vmatprep.subr.mxu0 0.0
  %271 = vmatpush2.msra.mxu0 0.0
  %272 = vmatprep.subr.mxu0 0.0
  %273 = vmatpush2.msra.mxu0 0.0
  %274 = vmatprep.subr.mxu0 0.0
  %275 = vmatpush2.msra.mxu0 0.0
  %276 = vmatprep.subr.mxu0 0.0
  %277 = vmatpush2.msra.mxu0 0.0
  %278 = vmatprep.subr.mxu0 0.0
  %279 = vmatpush2.msra.mxu0 0.0
  %280 = vmatprep.subr.mxu0 0.0
  %281 = vmatpush2.msra.mxu0 0.0
  %282 = vmatprep.subr.mxu0 0.0
  %283 = vmatpush2.msra.mxu0 0.0
  %284 = vmatprep.subr.mxu0 0.0
  %285 = vmatpush2.msra.mxu0 0.0
  %286 = vmatprep.subr.mxu0 0.0
  %287 = vmatpush2.msra.mxu0 0.0
  %288 = vmatprep.subr.mxu0 0.0
  %289 = vmatpush2.msra.mxu0 0.0
  %290 = vmatprep.subr.mxu0 0.0
  %291 = vmatpush2.msra.mxu0 0.0
  %292 = vmatprep.mubr.f32.mxu0 0.0
  %293 = vmatmul.mubr.f32.gmra.mxu0 %v226
  %v294 = vpop.f32.mrf.mxu0
  %v295 = vadd.f32 0.0, %v294
  %v296 = vpop.f32.mrf.mxu0
  %297 = vdwg.mxu0
  %v298 = vadd.f32 %v224, %v295
  %v299 = vxor.u32 %v298, 2147483648
  %v300 = vmul.f32 %v299, 1.442695
  %v301 = vpow.pop %v300
  %v302 = vadd.f32 %v301, 1.0
  %v303 = vrcp.pop %v302
  %v304 = vmul.f32 1.0, %v303
  %v305 = vtanh.pop %v298
  %306 = vrot.lane.b32.xlu0 %v304, 96
  %v307 = vpop.permute.xlu0 %306
  %308 = vrot.lane.b32.xlu0 %v304, 64
  %v309 = vpop.permute.xlu0 %308
  %310 = vrot.lane.b32.xlu0 %v305, 32
  %v311 = vpop.permute.xlu0 %310
  %v312 = vmul.f32 %v307, %v222
  %v313 = vmul.f32 %v304, %v311
  %v314 = vadd.f32 %v312, %v313
  %v315 = vtanh.pop %v314
  %v316 = vmul.f32 %v309, %v315
  %vm317 = vcmp.gt.s32.totalorder %v14, 2
  %v318 = vsel %vm317, 1, 0
  %319 = vset.pattern.permute.xlu0 0
  %320 = vperm.xlu0 %319, %v318
  %v321 = vpop.permute.xlu0 %320
  %vm322 = vcmp.eq.s32.totalorder %v321, 1
  %v323 = vsel %vm322, %v316, %v221
  %v324 = vsel %vm322, %v314, %v222
  %s325 = scalar_lea.vmem %s1, 24
  %v326 = vld [vmem:[%s325] sm:$0xff]
  %v328 = vsel %vm20, %v323, 0
  %330 = vmatprep.subr.mxu0 0.0
  %331 = vmatpush1.msra.mxu0 0.0
  %332 = vmatprep.subr.mxu0 0.0
  %333 = vmatpush1.msra.mxu0 0.0
  %334 = vmatprep.subr.mxu0 0.0
  %335 = vmatpush1.msra.mxu0 0.0
  %336 = vmatprep.subr.mxu0 0.0
  %337 = vmatpush1.msra.mxu0 0.0
  %338 = vmatprep.subr.mxu0 0.0
  %339 = vmatpush1.msra.mxu0 0.0
  %340 = vmatprep.subr.mxu0 0.0
  %341 = vmatpush1.msra.mxu0 0.0
  %342 = vmatprep.subr.mxu0 0.0
  %343 = vmatpush1.msra.mxu0 0.0
  %344 = vmatprep.subr.mxu0 0.0
  %345 = vmatpush1.msra.mxu0 0.0
  %346 = vmatprep.subr.mxu0 0.0
  %347 = vmatpush1.msra.mxu0 0.0
  %348 = vmatprep.subr.mxu0 0.0
  %349 = vmatpush1.msra.mxu0 0.0
  %350 = vmatprep.subr.mxu0 0.0
  %351 = vmatpush1.msra.mxu0 0.0
  %352 = vmatprep.subr.mxu0 0.0
  %353 = vmatpush1.msra.mxu0 0.0
  %354 = vmatprep.subr.mxu0 0.0
  %355 = vmatpush1.msra.mxu0 %v18
  %356 = vmatprep.subr.mxu0 0.0
  %357 = vmatpush1.msra.mxu0 %v17
  %358 = vmatprep.subr.mxu0 0.0
  %359 = vmatpush1.msra.mxu0 %v16
  %360 = vmatprep.subr.mxu0 0.0
  %361 = vmatpush1.msra.mxu0 %v15
  %362 = vmatprep.subr.mxu0 0.0
  %363 = vmatpush2.msra.mxu0 0.0
  %364 = vmatprep.subr.mxu0 0.0
  %365 = vmatpush2.msra.mxu0 0.0
  %366 = vmatprep.subr.mxu0 0.0
  %367 = vmatpush2.msra.mxu0 0.0
  %368 = vmatprep.subr.mxu0 0.0
  %369 = vmatpush2.msra.mxu0 0.0
  %370 = vmatprep.subr.mxu0 0.0
  %371 = vmatpush2.msra.mxu0 0.0
  %372 = vmatprep.subr.mxu0 0.0
  %373 = vmatpush2.msra.mxu0 0.0
  %374 = vmatprep.subr.mxu0 0.0
  %375 = vmatpush2.msra.mxu0 0.0
  %376 = vmatprep.subr.mxu0 0.0
  %377 = vmatpush2.msra.mxu0 0.0
  %378 = vmatprep.subr.mxu0 0.0
  %379 = vmatpush2.msra.mxu0 0.0
  %380 = vmatprep.subr.mxu0 0.0
  %381 = vmatpush2.msra.mxu0 0.0
  %382 = vmatprep.subr.mxu0 0.0
  %383 = vmatpush2.msra.mxu0 0.0
  %384 = vmatprep.subr.mxu0 0.0
  %385 = vmatpush2.msra.mxu0 0.0
  %386 = vmatprep.subr.mxu0 0.0
  %387 = vmatpush2.msra.mxu0 0.0
  %388 = vmatprep.subr.mxu0 0.0
  %389 = vmatpush2.msra.mxu0 0.0
  %390 = vmatprep.subr.mxu0 0.0
  %391 = vmatpush2.msra.mxu0 0.0
  %392 = vmatprep.subr.mxu0 0.0
  %393 = vmatpush2.msra.mxu0 0.0
  %394 = vmatprep.mubr.f32.mxu0 0.0
  %395 = vmatmul.mubr.f32.gmra.mxu0 %v328
  %v396 = vpop.f32.mrf.mxu0
  %v397 = vadd.f32 0.0, %v396
  %v398 = vpop.f32.mrf.mxu0
  %399 = vdwg.mxu0
  %v400 = vadd.f32 %v326, %v397
  %v401 = vxor.u32 %v400, 2147483648
  %v402 = vmul.f32 %v401, 1.442695
  %v403 = vpow.pop %v402
  %v404 = vadd.f32 %v403, 1.0
  %v405 = vrcp.pop %v404
  %v406 = vmul.f32 1.0, %v405
  %v407 = vtanh.pop %v400
  %408 = vrot.lane.b32.xlu0 %v406, 96
  %v409 = vpop.permute.xlu0 %408
  %410 = vrot.lane.b32.xlu0 %v406, 64
  %v411 = vpop.permute.xlu0 %410
  %412 = vrot.lane.b32.xlu0 %v407, 32
  %v413 = vpop.permute.xlu0 %412
  %v414 = vmul.f32 %v409, %v324
  %v415 = vmul.f32 %v406, %v413
  %v416 = vadd.f32 %v414, %v415
  %v417 = vtanh.pop %v416
  %v418 = vmul.f32 %v411, %v417
  %vm419 = vcmp.gt.s32.totalorder %v14, 3
  %v420 = vsel %vm419, 1, 0
  %421 = vset.pattern.permute.xlu0 0
  %422 = vperm.xlu0 %421, %v420
  %v423 = vpop.permute.xlu0 %422
  %vm424 = vcmp.eq.s32.totalorder %v423, 1
  %v425 = vsel %vm424, %v418, %v323
  %v426 = vsel %vm424, %v416, %v324
  %s427 = scalar_lea.vmem %s1, 32
  %v428 = vld [vmem:[%s427] sm:$0xff]
  %v430 = vsel %vm20, %v425, 0
  %432 = vmatprep.subr.mxu0 0.0
  %433 = vmatpush1.msra.mxu0 0.0
  %434 = vmatprep.subr.mxu0 0.0
  %435 = vmatpush1.msra.mxu0 0.0
  %436 = vmatprep.subr.mxu0 0.0
  %437 = vmatpush1.msra.mxu0 0.0
  %438 = vmatprep.subr.mxu0 0.0
  %439 = vmatpush1.msra.mxu0 0.0
  %440 = vmatprep.subr.mxu0 0.0
  %441 = vmatpush1.msra.mxu0 0.0
  %442 = vmatprep.subr.mxu0 0.0
  %443 = vmatpush1.msra.mxu0 0.0
  %444 = vmatprep.subr.mxu0 0.0
  %445 = vmatpush1.msra.mxu0 0.0
  %446 = vmatprep.subr.mxu0 0.0
  %447 = vmatpush1.msra.mxu0 0.0
  %448 = vmatprep.subr.mxu0 0.0
  %449 = vmatpush1.msra.mxu0 0.0
  %450 = vmatprep.subr.mxu0 0.0
  %451 = vmatpush1.msra.mxu0 0.0
  %452 = vmatprep.subr.mxu0 0.0
  %453 = vmatpush1.msra.mxu0 0.0
  %454 = vmatprep.subr.mxu0 0.0
  %455 = vmatpush1.msra.mxu0 0.0
  %456 = vmatprep.subr.mxu0 0.0
  %457 = vmatpush1.msra.mxu0 %v18
  %458 = vmatprep.subr.mxu0 0.0
  %459 = vmatpush1.msra.mxu0 %v17
  %460 = vmatprep.subr.mxu0 0.0
  %461 = vmatpush1.msra.mxu0 %v16
  %462 = vmatprep.subr.mxu0 0.0
  %463 = vmatpush1.msra.mxu0 %v15
  %464 = vmatprep.subr.mxu0 0.0
  %465 = vmatpush2.msra.mxu0 0.0
  %466 = vmatprep.subr.mxu0 0.0
  %467 = vmatpush2.msra.mxu0 0.0
  %468 = vmatprep.subr.mxu0 0.0
  %469 = vmatpush2.msra.mxu0 0.0
  %470 = vmatprep.subr.mxu0 0.0
  %471 = vmatpush2.msra.mxu0 0.0
  %472 = vmatprep.subr.mxu0 0.0
  %473 = vmatpush2.msra.mxu0 0.0
  %474 = vmatprep.subr.mxu0 0.0
  %475 = vmatpush2.msra.mxu0 0.0
  %476 = vmatprep.subr.mxu0 0.0
  %477 = vmatpush2.msra.mxu0 0.0
  %478 = vmatprep.subr.mxu0 0.0
  %479 = vmatpush2.msra.mxu0 0.0
  %480 = vmatprep.subr.mxu0 0.0
  %481 = vmatpush2.msra.mxu0 0.0
  %482 = vmatprep.subr.mxu0 0.0
  %483 = vmatpush2.msra.mxu0 0.0
  %484 = vmatprep.subr.mxu0 0.0
  %485 = vmatpush2.msra.mxu0 0.0
  %486 = vmatprep.subr.mxu0 0.0
  %487 = vmatpush2.msra.mxu0 0.0
  %488 = vmatprep.subr.mxu0 0.0
  %489 = vmatpush2.msra.mxu0 0.0
  %490 = vmatprep.subr.mxu0 0.0
  %491 = vmatpush2.msra.mxu0 0.0
  %492 = vmatprep.subr.mxu0 0.0
  %493 = vmatpush2.msra.mxu0 0.0
  %494 = vmatprep.subr.mxu0 0.0
  %495 = vmatpush2.msra.mxu0 0.0
  %496 = vmatprep.mubr.f32.mxu0 0.0
  %497 = vmatmul.mubr.f32.gmra.mxu0 %v430
  %v498 = vpop.f32.mrf.mxu0
  %v499 = vadd.f32 0.0, %v498
  %v500 = vpop.f32.mrf.mxu0
  %501 = vdwg.mxu0
  %v502 = vadd.f32 %v428, %v499
  %v503 = vxor.u32 %v502, 2147483648
  %v504 = vmul.f32 %v503, 1.442695
  %v505 = vpow.pop %v504
  %v506 = vadd.f32 %v505, 1.0
  %v507 = vrcp.pop %v506
  %v508 = vmul.f32 1.0, %v507
  %v509 = vtanh.pop %v502
  %510 = vrot.lane.b32.xlu0 %v508, 96
  %v511 = vpop.permute.xlu0 %510
  %512 = vrot.lane.b32.xlu0 %v508, 64
  %v513 = vpop.permute.xlu0 %512
  %514 = vrot.lane.b32.xlu0 %v509, 32
  %v515 = vpop.permute.xlu0 %514
  %v516 = vmul.f32 %v511, %v426
  %v517 = vmul.f32 %v508, %v515
  %v518 = vadd.f32 %v516, %v517
  %v519 = vtanh.pop %v518
  %v520 = vmul.f32 %v513, %v519
  %vm521 = vcmp.gt.s32.totalorder %v14, 4
  %v522 = vsel %vm521, 1, 0
  %523 = vset.pattern.permute.xlu0 0
  %524 = vperm.xlu0 %523, %v522
  %v525 = vpop.permute.xlu0 %524
  %vm526 = vcmp.eq.s32.totalorder %v525, 1
  %v527 = vsel %vm526, %v520, %v425
  %v528 = vsel %vm526, %v518, %v426
  %s529 = scalar_lea.vmem %s1, 40
  %v530 = vld [vmem:[%s529] sm:$0xff]
  %v532 = vsel %vm20, %v527, 0
  %534 = vmatprep.subr.mxu0 0.0
  %535 = vmatpush1.msra.mxu0 0.0
  %536 = vmatprep.subr.mxu0 0.0
  %537 = vmatpush1.msra.mxu0 0.0
  %538 = vmatprep.subr.mxu0 0.0
  %539 = vmatpush1.msra.mxu0 0.0
  %540 = vmatprep.subr.mxu0 0.0
  %541 = vmatpush1.msra.mxu0 0.0
  %542 = vmatprep.subr.mxu0 0.0
  %543 = vmatpush1.msra.mxu0 0.0
  %544 = vmatprep.subr.mxu0 0.0
  %545 = vmatpush1.msra.mxu0 0.0
  %546 = vmatprep.subr.mxu0 0.0
  %547 = vmatpush1.msra.mxu0 0.0
  %548 = vmatprep.subr.mxu0 0.0
  %549 = vmatpush1.msra.mxu0 0.0
  %550 = vmatprep.subr.mxu0 0.0
  %551 = vmatpush1.msra.mxu0 0.0
  %552 = vmatprep.subr.mxu0 0.0
  %553 = vmatpush1.msra.mxu0 0.0
  %554 = vmatprep.subr.mxu0 0.0
  %555 = vmatpush1.msra.mxu0 0.0
  %556 = vmatprep.subr.mxu0 0.0
  %557 = vmatpush1.msra.mxu0 0.0
  %558 = vmatprep.subr.mxu0 0.0
  %559 = vmatpush1.msra.mxu0 %v18
  %560 = vmatprep.subr.mxu0 0.0
  %561 = vmatpush1.msra.mxu0 %v17
  %562 = vmatprep.subr.mxu0 0.0
  %563 = vmatpush1.msra.mxu0 %v16
  %564 = vmatprep.subr.mxu0 0.0
  %565 = vmatpush1.msra.mxu0 %v15
  %566 = vmatprep.subr.mxu0 0.0
  %567 = vmatpush2.msra.mxu0 0.0
  %568 = vmatprep.subr.mxu0 0.0
  %569 = vmatpush2.msra.mxu0 0.0
  %570 = vmatprep.subr.mxu0 0.0
  %571 = vmatpush2.msra.mxu0 0.0
  %572 = vmatprep.subr.mxu0 0.0
  %573 = vmatpush2.msra.mxu0 0.0
  %574 = vmatprep.subr.mxu0 0.0
  %575 = vmatpush2.msra.mxu0 0.0
  %576 = vmatprep.subr.mxu0 0.0
  %577 = vmatpush2.msra.mxu0 0.0
  %578 = vmatprep.subr.mxu0 0.0
  %579 = vmatpush2.msra.mxu0 0.0
  %580 = vmatprep.subr.mxu0 0.0
  %581 = vmatpush2.msra.mxu0 0.0
  %582 = vmatprep.subr.mxu0 0.0
  %583 = vmatpush2.msra.mxu0 0.0
  %584 = vmatprep.subr.mxu0 0.0
  %585 = vmatpush2.msra.mxu0 0.0
  %586 = vmatprep.subr.mxu0 0.0
  %587 = vmatpush2.msra.mxu0 0.0
  %588 = vmatprep.subr.mxu0 0.0
  %589 = vmatpush2.msra.mxu0 0.0
  %590 = vmatprep.subr.mxu0 0.0
  %591 = vmatpush2.msra.mxu0 0.0
  %592 = vmatprep.subr.mxu0 0.0
  %593 = vmatpush2.msra.mxu0 0.0
  %594 = vmatprep.subr.mxu0 0.0
  %595 = vmatpush2.msra.mxu0 0.0
  %596 = vmatprep.subr.mxu0 0.0
  %597 = vmatpush2.msra.mxu0 0.0
  %598 = vmatprep.mubr.f32.mxu0 0.0
  %599 = vmatmul.mubr.f32.gmra.mxu0 %v532
  %v600 = vpop.f32.mrf.mxu0
  %v601 = vadd.f32 0.0, %v600
  %v602 = vpop.f32.mrf.mxu0
  %603 = vdwg.mxu0
  %v604 = vadd.f32 %v530, %v601
  %v605 = vxor.u32 %v604, 2147483648
  %v606 = vmul.f32 %v605, 1.442695
  %v607 = vpow.pop %v606
  %v608 = vadd.f32 %v607, 1.0
  %v609 = vrcp.pop %v608
  %v610 = vmul.f32 1.0, %v609
  %v611 = vtanh.pop %v604
  %612 = vrot.lane.b32.xlu0 %v610, 96
  %v613 = vpop.permute.xlu0 %612
  %614 = vrot.lane.b32.xlu0 %v610, 64
  %v615 = vpop.permute.xlu0 %614
  %616 = vrot.lane.b32.xlu0 %v611, 32
  %v617 = vpop.permute.xlu0 %616
  %v618 = vmul.f32 %v613, %v528
  %v619 = vmul.f32 %v610, %v617
  %v620 = vadd.f32 %v618, %v619
  %v621 = vtanh.pop %v620
  %v622 = vmul.f32 %v615, %v621
  %vm623 = vcmp.gt.s32.totalorder %v14, 5
  %v624 = vsel %vm623, 1, 0
  %625 = vset.pattern.permute.xlu0 0
  %626 = vperm.xlu0 %625, %v624
  %v627 = vpop.permute.xlu0 %626
  %vm628 = vcmp.eq.s32.totalorder %v627, 1
  %v629 = vsel %vm628, %v622, %v527
  %v630 = vsel %vm628, %v620, %v528
  %s631 = scalar_lea.vmem %s1, 48
  %v632 = vld [vmem:[%s631] sm:$0xff]
  %v634 = vsel %vm20, %v629, 0
  %636 = vmatprep.subr.mxu0 0.0
  %637 = vmatpush1.msra.mxu0 0.0
  %638 = vmatprep.subr.mxu0 0.0
  %639 = vmatpush1.msra.mxu0 0.0
  %640 = vmatprep.subr.mxu0 0.0
  %641 = vmatpush1.msra.mxu0 0.0
  %642 = vmatprep.subr.mxu0 0.0
  %643 = vmatpush1.msra.mxu0 0.0
  %644 = vmatprep.subr.mxu0 0.0
  %645 = vmatpush1.msra.mxu0 0.0
  %646 = vmatprep.subr.mxu0 0.0
  %647 = vmatpush1.msra.mxu0 0.0
  %648 = vmatprep.subr.mxu0 0.0
  %649 = vmatpush1.msra.mxu0 0.0
  %650 = vmatprep.subr.mxu0 0.0
  %651 = vmatpush1.msra.mxu0 0.0
  %652 = vmatprep.subr.mxu0 0.0
  %653 = vmatpush1.msra.mxu0 0.0
  %654 = vmatprep.subr.mxu0 0.0
  %655 = vmatpush1.msra.mxu0 0.0
  %656 = vmatprep.subr.mxu0 0.0
  %657 = vmatpush1.msra.mxu0 0.0
  %658 = vmatprep.subr.mxu0 0.0
  %659 = vmatpush1.msra.mxu0 0.0
  %660 = vmatprep.subr.mxu0 0.0
  %661 = vmatpush1.msra.mxu0 %v18
  %662 = vmatprep.subr.mxu0 0.0
  %663 = vmatpush1.msra.mxu0 %v17
  %664 = vmatprep.subr.mxu0 0.0
  %665 = vmatpush1.msra.mxu0 %v16
  %666 = vmatprep.subr.mxu0 0.0
  %667 = vmatpush1.msra.mxu0 %v15
  %668 = vmatprep.subr.mxu0 0.0
  %669 = vmatpush2.msra.mxu0 0.0
  %670 = vmatprep.subr.mxu0 0.0
  %671 = vmatpush2.msra.mxu0 0.0
  %672 = vmatprep.subr.mxu0 0.0
  %673 = vmatpush2.msra.mxu0 0.0
  %674 = vmatprep.subr.mxu0 0.0
  %675 = vmatpush2.msra.mxu0 0.0
  %676 = vmatprep.subr.mxu0 0.0
  %677 = vmatpush2.msra.mxu0 0.0
  %678 = vmatprep.subr.mxu0 0.0
  %679 = vmatpush2.msra.mxu0 0.0
  %680 = vmatprep.subr.mxu0 0.0
  %681 = vmatpush2.msra.mxu0 0.0
  %682 = vmatprep.subr.mxu0 0.0
  %683 = vmatpush2.msra.mxu0 0.0
  %684 = vmatprep.subr.mxu0 0.0
  %685 = vmatpush2.msra.mxu0 0.0
  %686 = vmatprep.subr.mxu0 0.0
  %687 = vmatpush2.msra.mxu0 0.0
  %688 = vmatprep.subr.mxu0 0.0
  %689 = vmatpush2.msra.mxu0 0.0
  %690 = vmatprep.subr.mxu0 0.0
  %691 = vmatpush2.msra.mxu0 0.0
  %692 = vmatprep.subr.mxu0 0.0
  %693 = vmatpush2.msra.mxu0 0.0
  %694 = vmatprep.subr.mxu0 0.0
  %695 = vmatpush2.msra.mxu0 0.0
  %696 = vmatprep.subr.mxu0 0.0
  %697 = vmatpush2.msra.mxu0 0.0
  %698 = vmatprep.subr.mxu0 0.0
  %699 = vmatpush2.msra.mxu0 0.0
  %700 = vmatprep.mubr.f32.mxu0 0.0
  %701 = vmatmul.mubr.f32.gmra.mxu0 %v634
  %v702 = vpop.f32.mrf.mxu0
  %v703 = vadd.f32 0.0, %v702
  %v704 = vpop.f32.mrf.mxu0
  %705 = vdwg.mxu0
  %v706 = vadd.f32 %v632, %v703
  %v707 = vxor.u32 %v706, 2147483648
  %v708 = vmul.f32 %v707, 1.442695
  %v709 = vpow.pop %v708
  %v710 = vadd.f32 %v709, 1.0
  %v711 = vrcp.pop %v710
  %v712 = vmul.f32 1.0, %v711
  %v713 = vtanh.pop %v706
  %714 = vrot.lane.b32.xlu0 %v712, 96
  %v715 = vpop.permute.xlu0 %714
  %716 = vrot.lane.b32.xlu0 %v712, 64
  %v717 = vpop.permute.xlu0 %716
  %718 = vrot.lane.b32.xlu0 %v713, 32
  %v719 = vpop.permute.xlu0 %718
  %v720 = vmul.f32 %v715, %v630
  %v721 = vmul.f32 %v712, %v719
  %v722 = vadd.f32 %v720, %v721
  %v723 = vtanh.pop %v722
  %v724 = vmul.f32 %v717, %v723
  %vm725 = vcmp.gt.s32.totalorder %v14, 6
  %v726 = vsel %vm725, 1, 0
  %727 = vset.pattern.permute.xlu0 0
  %728 = vperm.xlu0 %727, %v726
  %v729 = vpop.permute.xlu0 %728
  %vm730 = vcmp.eq.s32.totalorder %v729, 1
  %v731 = vsel %vm730, %v724, %v629
  %v732 = vsel %vm730, %v722, %v630
  %s733 = scalar_lea.vmem %s1, 56
  %v734 = vld [vmem:[%s733] sm:$0xff]
  %v736 = vsel %vm20, %v731, 0
  %738 = vmatprep.subr.mxu0 0.0
  %739 = vmatpush1.msra.mxu0 0.0
  %740 = vmatprep.subr.mxu0 0.0
  %741 = vmatpush1.msra.mxu0 0.0
  %742 = vmatprep.subr.mxu0 0.0
  %743 = vmatpush1.msra.mxu0 0.0
  %744 = vmatprep.subr.mxu0 0.0
  %745 = vmatpush1.msra.mxu0 0.0
  %746 = vmatprep.subr.mxu0 0.0
  %747 = vmatpush1.msra.mxu0 0.0
  %748 = vmatprep.subr.mxu0 0.0
  %749 = vmatpush1.msra.mxu0 0.0
  %750 = vmatprep.subr.mxu0 0.0
  %751 = vmatpush1.msra.mxu0 0.0
  %752 = vmatprep.subr.mxu0 0.0
  %753 = vmatpush1.msra.mxu0 0.0
  %754 = vmatprep.subr.mxu0 0.0
  %755 = vmatpush1.msra.mxu0 0.0
  %756 = vmatprep.subr.mxu0 0.0
  %757 = vmatpush1.msra.mxu0 0.0
  %758 = vmatprep.subr.mxu0 0.0
  %759 = vmatpush1.msra.mxu0 0.0
  %760 = vmatprep.subr.mxu0 0.0
  %761 = vmatpush1.msra.mxu0 0.0
  %762 = vmatprep.subr.mxu0 0.0
  %763 = vmatpush1.msra.mxu0 %v18
  %764 = vmatprep.subr.mxu0 0.0
  %765 = vmatpush1.msra.mxu0 %v17
  %766 = vmatprep.subr.mxu0 0.0
  %767 = vmatpush1.msra.mxu0 %v16
  %768 = vmatprep.subr.mxu0 0.0
  %769 = vmatpush1.msra.mxu0 %v15
  %770 = vmatprep.subr.mxu0 0.0
  %771 = vmatpush2.msra.mxu0 0.0
  %772 = vmatprep.subr.mxu0 0.0
  %773 = vmatpush2.msra.mxu0 0.0
  %774 = vmatprep.subr.mxu0 0.0
  %775 = vmatpush2.msra.mxu0 0.0
  %776 = vmatprep.subr.mxu0 0.0
  %777 = vmatpush2.msra.mxu0 0.0
  %778 = vmatprep.subr.mxu0 0.0
  %779 = vmatpush2.msra.mxu0 0.0
  %780 = vmatprep.subr.mxu0 0.0
  %781 = vmatpush2.msra.mxu0 0.0
  %782 = vmatprep.subr.mxu0 0.0
  %783 = vmatpush2.msra.mxu0 0.0
  %784 = vmatprep.subr.mxu0 0.0
  %785 = vmatpush2.msra.mxu0 0.0
  %786 = vmatprep.subr.mxu0 0.0
  %787 = vmatpush2.msra.mxu0 0.0
  %788 = vmatprep.subr.mxu0 0.0
  %789 = vmatpush2.msra.mxu0 0.0
  %790 = vmatprep.subr.mxu0 0.0
  %791 = vmatpush2.msra.mxu0 0.0
  %792 = vmatprep.subr.mxu0 0.0
  %793 = vmatpush2.msra.mxu0 0.0
  %794 = vmatprep.subr.mxu0 0.0
  %795 = vmatpush2.msra.mxu0 0.0
  %796 = vmatprep.subr.mxu0 0.0
  %797 = vmatpush2.msra.mxu0 0.0
  %798 = vmatprep.subr.mxu0 0.0
  %799 = vmatpush2.msra.mxu0 0.0
  %800 = vmatprep.subr.mxu0 0.0
  %801 = vmatpush2.msra.mxu0 0.0
  %802 = vmatprep.mubr.f32.mxu0 0.0
  %803 = vmatmul.mubr.f32.gmra.mxu0 %v736
  %v804 = vpop.f32.mrf.mxu0
  %v805 = vadd.f32 0.0, %v804
  %v806 = vpop.f32.mrf.mxu0
  %807 = vdwg.mxu0
  %v808 = vadd.f32 %v734, %v805
  %v809 = vxor.u32 %v808, 2147483648
  %v810 = vmul.f32 %v809, 1.442695
  %v811 = vpow.pop %v810
  %v812 = vadd.f32 %v811, 1.0
  %v813 = vrcp.pop %v812
  %v814 = vmul.f32 1.0, %v813
  %v815 = vtanh.pop %v808
  %816 = vrot.lane.b32.xlu0 %v814, 96
  %v817 = vpop.permute.xlu0 %816
  %818 = vrot.lane.b32.xlu0 %v814, 64
  %v819 = vpop.permute.xlu0 %818
  %820 = vrot.lane.b32.xlu0 %v815, 32
  %v821 = vpop.permute.xlu0 %820
  %v822 = vmul.f32 %v817, %v732
  %v823 = vmul.f32 %v814, %v821
  %v824 = vadd.f32 %v822, %v823
  %v825 = vtanh.pop %v824
  %v826 = vmul.f32 %v819, %v825
  %vm827 = vcmp.gt.s32.totalorder %v14, 7
  %v828 = vsel %vm827, 1, 0
  %829 = vset.pattern.permute.xlu0 0
  %830 = vperm.xlu0 %829, %v828
  %v831 = vpop.permute.xlu0 %830
  %vm832 = vcmp.eq.s32.totalorder %v831, 1
  %v833 = vsel %vm832, %v826, %v731
  %834 = vst.msk [vmem:[%s3] sm:$0xff] %vm20, %v833
  // Predicated region
  $region14: #{instruction_encoder_forward.1} parent=0 // pred_check
    _
  $region15: #{instruction_encoder_forward.1} parent=0 // pred_check_branch
    %836 = sbr.rel (0) target = $region17
  $region16: #{instruction_encoder_forward.1} parent=0 // pred_region
    _
  $region17: #{instruction_encoder_forward.1} parent=0 // pred_fallthru
    _
  // Predicated region
  $region18: #{instruction_encoder_forward.1} parent=0 // pred_check
    _
  $region19: #{instruction_encoder_forward.1} parent=0 // pred_check_branch
    %838 = sbr.rel (0) target = $region21
  $region20: #{instruction_encoder_forward.1} parent=0 // pred_region
    _
  $region21: #{instruction_encoder_forward.1} parent=0 // pred_fallthru
    _

</llo_original>
